<compile_context>
chip_gen: v5e
topology: v5e:2x2
jax: 0.10.0
libtpu: 0.0.40
codegen_flags: <defaults>
</compile_context>

<pallas_src>
import functools

import jax
import jax.numpy as jnp
from jax.experimental import pallas as pl
from jax.experimental.pallas import tpu as pltpu  # noqa: F401  (kept for TPU-specific extensions)

LEAKY_ALPHA = 0.01      # nn.LeakyReLU(alpha)
THRESH = 1e-6           # interaction_thresh (graph_lap=True path)
NEG_BIG = -9e15         # zero_vec value in the reference code
LANE = 128


def _gat2_kernel(x_ref, adj_ref, w0_ref, w1_ref, out_ref,
                 *, fpad, f1_col, f2_col, fout, batch):
    """Fused 2-layer GAT forward for the whole (small) batch in one step.

    x_ref:   (B, S, Fin)        adj_ref: (B, S, S)
    w0_ref:  (Fin,  ext)        w1_ref:  (FPAD, ext)
             columns [:Fout] hold W, column f1_col holds W @ a[:Fout],
             column f2_col holds W @ a[Fout:], rows >= Fout are zero.
    out_ref: (B, S, Fout)
    """
    w0 = w0_ref[...]
    w1 = w1_ref[...]

    def attention_layer(inp, w, mask):
        # Projection + both folded attention columns in one MXU matmul.
        hf = jnp.dot(inp, w, preferred_element_type=jnp.float32)   # (S, ext)
        h = hf[:, :fpad]                                           # (S, FPAD)
        f1 = hf[:, f1_col:f1_col + 1]                              # (S, 1) = h @ a[:F]
        # f2 as a lane-dense row via one tile transpose (XLU slot is idle).
        hft = hf.T                                                 # (ext, S)
        f2_row = hft[f2_col:f2_col + 1, :]                         # (1, S) = (h @ a[F:])^T
        e = f1 + f2_row                                            # (S, S)
        e = jnp.where(e > 0, e, LEAKY_ALPHA * e)                   # LeakyReLU(0.01)
        logits = jnp.where(mask, e, NEG_BIG)
        logits = logits - jnp.max(logits, axis=-1, keepdims=True)
        p = jnp.exp(logits)
        att = p / jnp.sum(p, axis=-1, keepdims=True)               # exact softmax
        # TODO(synk): F.dropout(p=0.1) on attention omitted (inference semantics).
        hp = jnp.dot(att, h, preferred_element_type=jnp.float32)   # (S, FPAD)
        # ELU(alpha=1); clamp the discarded branch so exp() cannot overflow.
        return jnp.where(hp > 0, hp, jnp.exp(jnp.minimum(hp, 0.0)) - 1.0)

    # Static (unrolled) batch loop: single grid step, no per-batch DMAs; layer-0
    # activations never leave VMEM/vregs and the adjacency mask is reused.
    for b in range(batch):
        mask = jnp.abs(adj_ref[b]) > THRESH
        out0 = attention_layer(x_ref[b], w0, mask)
        out1 = attention_layer(out0, w1, mask)
        out_ref[b] = out1[:, :fout]          # drop padding lanes before the store


def _extend_weights(W, a, in_rows, ext_cols, f1_col, f2_col):
    """Build W_ext (in_rows, ext_cols): W in [:, :Fout], W @ a[:Fout] in column
    f1_col, W @ a[Fout:] in column f2_col, zeros elsewhere (rows >= Fout zero)."""
    fin, fout = W.shape
    a1 = a[:fout, :]                       # (Fout, 1)
    a2 = a[fout:, :]                       # (Fout, 1)
    w_ext = jnp.zeros((in_rows, ext_cols), jnp.float32)
    w_ext = w_ext.at[:fin, :fout].set(W)
    w_ext = w_ext.at[:fin, f1_col:f1_col + 1].set(W @ a1)
    w_ext = w_ext.at[:fin, f2_col:f2_col + 1].set(W @ a2)
    return w_ext


def gat_forward(x, edge, params):
    """GAT.forward: edge[..., 0] is the adjacency used by every layer.
    num_gcn_layers=2 -> layer0 followed by the last ModuleList layer
    (the `[:-1]` loop is empty, so `activation` never applies)."""
    adj = edge[..., 0]
    B, S, Fin = x.shape
    Fout = params["W0"].shape[1]
    fpad = ((Fout + LANE - 1) // LANE) * LANE
    # Stash the two folded attention columns inside the zero padding when there
    # is room, otherwise append one extra lane block.
    if Fout + 2 <= fpad:
        ext_cols, f1_col, f2_col = fpad, Fout, Fout + 1
    else:
        ext_cols, f1_col, f2_col = fpad + LANE, fpad, fpad + 1

    # In a real model these extended weights would be precomputed once.
    w0_ext = _extend_weights(params["W0"], params["a0"], Fin, ext_cols, f1_col, f2_col)
    w1_ext = _extend_weights(params["W1"], params["a1"], fpad, ext_cols, f1_col, f2_col)

    kernel = functools.partial(_gat2_kernel, fpad=fpad, f1_col=f1_col,
                               f2_col=f2_col, fout=Fout, batch=B)
    # No grid: whole arrays (a few KiB total) live as single VMEM blocks -> one
    # DMA per operand, zero grid-step overhead, no wrapper-side post-slice.
    return pl.pallas_call(
        kernel,
        out_shape=jax.ShapeDtypeStruct((B, S, Fout), jnp.float32),
    )(x, adj, w0_ext, w1_ext)


# ------------------------- pure-JAX reference ---------------------------- #
def _ref_layer(node, adj, W, a):
    h = node @ W
    F = h.shape[-1]
    f1 = h @ a[:F]                              # (B, S, 1)
    f2 = h @ a[F:]                              # (B, S, 1)
    e = f1 + jnp.swapaxes(f2, -1, -2)           # (B, S, S)
    e = jnp.where(e > 0, e, LEAKY_ALPHA * e)
    att = jnp.where(jnp.abs(adj) > THRESH, e, NEG_BIG)
    att = jax.nn.softmax(att, axis=-1)
    hp = att @ h
    return jnp.where(hp > 0, hp, jnp.exp(hp) - 1.0)


def _ref_forward(x, edge, params):
    adj = edge[..., 0]
    out = _ref_layer(x, adj, params["W0"], params["a0"])
    return _ref_layer(out, adj, params["W1"], params["a1"])


# ------------------------------- main ------------------------------------ #
if __name__ == "__main__":
    key = jax.random.PRNGKey(0)
    B, S, Fin, Fout, E = 2, 8, 4, 96, 3   # node_feats=4, out_features=96

    k = jax.random.split(key, 7)
    x = jax.random.normal(k[0], (B, S, Fin), jnp.float32)
    edge = jax.random.normal(k[1], (B, S, S, E), jnp.float32)
    # make the Laplacian slice sparse so the |adj| > thresh mask is exercised
    mask = jax.random.bernoulli(k[2], 0.6, (B, S, S)).astype(jnp.float32)
    edge = edge.at[..., 0].multiply(mask)

    def xavier_normal(rng, shape):
        # xavier_normal_ with gain=sqrt(2): std = sqrt(2)*sqrt(2/(fan_in+fan_out))
        fan_in, fan_out = shape
        std = 2.0 / jnp.sqrt(jnp.float32(fan_in + fan_out))
        return std * jax.random.normal(rng, shape, jnp.float32)

    params = {
        "W0": xavier_normal(k[3], (Fin, Fout)),
        "a0": xavier_normal(k[4], (2 * Fout, 1)),
        "W1": xavier_normal(k[5], (Fout, Fout)),
        "a1": xavier_normal(k[6], (2 * Fout, 1)),
    }

    out = jax.jit(gat_forward)(x, edge, params)
    jax.block_until_ready(out)

    ref = _ref_forward(x, edge, params)
    assert out.shape == (B, S, Fout)
    # small tolerance: folding (x@W)@a into one matmul column reassociates the
    # reduction vs x@(W@a), so rounding differs slightly from the reference.
    assert jnp.allclose(out, ref, atol=1e-3, rtol=1e-3), "mismatch vs reference"

    print("KERNEL_OK")
</pallas_src>

<mosaic_0001>
module attributes {stable_mosaic.version = 11 : i64} {
  func.func @_gat2_kernel(%arg0: memref<2x8x4xf32, #tpu.memory_space<vmem>>, %arg1: memref<2x8x8xf32, #tpu.memory_space<vmem>>, %arg2: memref<4x128xf32, #tpu.memory_space<vmem>>, %arg3: memref<128x128xf32, #tpu.memory_space<vmem>>, %arg4: memref<2x8x96xf32, #tpu.memory_space<vmem>>) attributes {dimension_semantics = [], scalar_prefetch = 0 : i64, scratch_operands = 0 : i64, tpu.core_type = #tpu.core_type<tc>} {
    %c0 = arith.constant 0 : index
    %c0_0 = arith.constant 0 : index
    %0 = vector.load %arg2[%c0, %c0_0] : memref<4x128xf32, #tpu.memory_space<vmem>>, vector<4x128xf32>
    %c0_1 = arith.constant 0 : index
    %c0_2 = arith.constant 0 : index
    %1 = vector.load %arg3[%c0_1, %c0_2] : memref<128x128xf32, #tpu.memory_space<vmem>>, vector<128x128xf32>
    %c0_3 = arith.constant 0 : index
    %c0_4 = arith.constant 0 : index
    %c0_5 = arith.constant 0 : index
    %2 = vector.load %arg1[%c0_3, %c0_4, %c0_5] : memref<2x8x8xf32, #tpu.memory_space<vmem>>, vector<1x8x8xf32>
    %3 = vector.shape_cast %2 : vector<1x8x8xf32> to vector<8x8xf32>
    %4 = math.absf %3 : vector<8x8xf32>
    %cst = arith.constant 9.99999997E-7 : f32
    %5 = vector.broadcast %cst : f32 to vector<8x8xf32>
    %6 = arith.cmpf ogt, %4, %5 : vector<8x8xf32>
    %c0_6 = arith.constant 0 : index
    %c0_7 = arith.constant 0 : index
    %c0_8 = arith.constant 0 : index
    %7 = vector.load %arg0[%c0_6, %c0_7, %c0_8] : memref<2x8x4xf32, #tpu.memory_space<vmem>>, vector<1x8x4xf32>
    %8 = vector.shape_cast %7 : vector<1x8x4xf32> to vector<8x4xf32>
    %cst_9 = arith.constant dense<0.000000e+00> : vector<8x128xf32>
    %9 = tpu.matmul %8, %0, %cst_9 {dimension_numbers = #tpu.dot_dimension_numbers<[1], [0], [0], [1], [0, 0, 1, 1], [], []>} : vector<8x4xf32>, vector<4x128xf32>, vector<8x128xf32> -> vector<8x128xf32>
    %10 = vector.extract_strided_slice %9 {offsets = [0, 96], sizes = [8, 1], strides = [1, 1]} : vector<8x128xf32> to vector<8x1xf32>
    %11 = tpu.transpose %9, [1, 0] : vector<8x128xf32> -> vector<128x8xf32>
    %12 = vector.extract_strided_slice %11 {offsets = [97, 0], sizes = [1, 8], strides = [1, 1]} : vector<128x8xf32> to vector<1x8xf32>
    %13 = vector.broadcast %10 : vector<8x1xf32> to vector<8x8xf32>
    %14 = vector.broadcast %12 : vector<1x8xf32> to vector<8x8xf32>
    %15 = arith.addf %13, %14 : vector<8x8xf32>
    %cst_10 = arith.constant 0.000000e+00 : f32
    %16 = vector.broadcast %cst_10 : f32 to vector<8x8xf32>
    %17 = arith.cmpf ogt, %15, %16 : vector<8x8xf32>
    %cst_11 = arith.constant 0.00999999977 : f32
    %18 = vector.broadcast %cst_11 : f32 to vector<8x8xf32>
    %19 = arith.mulf %18, %15 : vector<8x8xf32>
    %20 = arith.select %17, %15, %19 : vector<8x8xi1>, vector<8x8xf32>
    %cst_12 = arith.constant -9.000000e+15 : f32
    %21 = vector.broadcast %cst_12 : f32 to vector<8x8xf32>
    %22 = arith.select %6, %20, %21 : vector<8x8xi1>, vector<8x8xf32>
    %cst_13 = arith.constant dense<0xFF800000> : vector<8xf32>
    %23 = vector.multi_reduction <maximumf>, %22, %cst_13 [1] : vector<8x8xf32> to vector<8xf32>
    %24 = vector.shape_cast %23 : vector<8xf32> to vector<8x1xf32>
    %25 = vector.broadcast %24 : vector<8x1xf32> to vector<8x8xf32>
    %26 = arith.subf %22, %25 : vector<8x8xf32>
    %27 = math.exp %26 : vector<8x8xf32>
    %cst_14 = arith.constant dense<0.000000e+00> : vector<8xf32>
    %28 = vector.multi_reduction <add>, %27, %cst_14 [1] : vector<8x8xf32> to vector<8xf32>
    %29 = vector.shape_cast %28 : vector<8xf32> to vector<8x1xf32>
    %30 = vector.broadcast %29 : vector<8x1xf32> to vector<8x8xf32>
    %31 = arith.divf %27, %30 : vector<8x8xf32>
    %cst_15 = arith.constant dense<0.000000e+00> : vector<8x128xf32>
    %32 = tpu.matmul %31, %9, %cst_15 {dimension_numbers = #tpu.dot_dimension_numbers<[1], [0], [0], [1], [0, 0, 1, 1], [], []>} : vector<8x8xf32>, vector<8x128xf32>, vector<8x128xf32> -> vector<8x128xf32>
    %cst_16 = arith.constant 0.000000e+00 : f32
    %33 = vector.broadcast %cst_16 : f32 to vector<8x128xf32>
    %34 = arith.cmpf ogt, %32, %33 : vector<8x128xf32>
    %cst_17 = arith.constant 0.000000e+00 : f32
    %35 = vector.broadcast %cst_17 : f32 to vector<8x128xf32>
    %36 = arith.minimumf %32, %35 : vector<8x128xf32>
    %37 = math.exp %36 : vector<8x128xf32>
    %cst_18 = arith.constant 1.000000e+00 : f32
    %38 = vector.broadcast %cst_18 : f32 to vector<8x128xf32>
    %39 = arith.subf %37, %38 : vector<8x128xf32>
    %40 = arith.select %34, %32, %39 : vector<8x128xi1>, vector<8x128xf32>
    %cst_19 = arith.constant dense<0.000000e+00> : vector<8x128xf32>
    %41 = tpu.matmul %40, %1, %cst_19 {dimension_numbers = #tpu.dot_dimension_numbers<[1], [0], [0], [1], [0, 0, 1, 1], [], []>} : vector<8x128xf32>, vector<128x128xf32>, vector<8x128xf32> -> vector<8x128xf32>
    %42 = vector.extract_strided_slice %41 {offsets = [0, 96], sizes = [8, 1], strides = [1, 1]} : vector<8x128xf32> to vector<8x1xf32>
    %43 = tpu.transpose %41, [1, 0] : vector<8x128xf32> -> vector<128x8xf32>
    %44 = vector.extract_strided_slice %43 {offsets = [97, 0], sizes = [1, 8], strides = [1, 1]} : vector<128x8xf32> to vector<1x8xf32>
    %45 = vector.broadcast %42 : vector<8x1xf32> to vector<8x8xf32>
    %46 = vector.broadcast %44 : vector<1x8xf32> to vector<8x8xf32>
    %47 = arith.addf %45, %46 : vector<8x8xf32>
    %cst_20 = arith.constant 0.000000e+00 : f32
    %48 = vector.broadcast %cst_20 : f32 to vector<8x8xf32>
    %49 = arith.cmpf ogt, %47, %48 : vector<8x8xf32>
    %cst_21 = arith.constant 0.00999999977 : f32
    %50 = vector.broadcast %cst_21 : f32 to vector<8x8xf32>
    %51 = arith.mulf %50, %47 : vector<8x8xf32>
    %52 = arith.select %49, %47, %51 : vector<8x8xi1>, vector<8x8xf32>
    %cst_22 = arith.constant -9.000000e+15 : f32
    %53 = vector.broadcast %cst_22 : f32 to vector<8x8xf32>
    %54 = arith.select %6, %52, %53 : vector<8x8xi1>, vector<8x8xf32>
    %cst_23 = arith.constant dense<0xFF800000> : vector<8xf32>
    %55 = vector.multi_reduction <maximumf>, %54, %cst_23 [1] : vector<8x8xf32> to vector<8xf32>
    %56 = vector.shape_cast %55 : vector<8xf32> to vector<8x1xf32>
    %57 = vector.broadcast %56 : vector<8x1xf32> to vector<8x8xf32>
    %58 = arith.subf %54, %57 : vector<8x8xf32>
    %59 = math.exp %58 : vector<8x8xf32>
    %cst_24 = arith.constant dense<0.000000e+00> : vector<8xf32>
    %60 = vector.multi_reduction <add>, %59, %cst_24 [1] : vector<8x8xf32> to vector<8xf32>
    %61 = vector.shape_cast %60 : vector<8xf32> to vector<8x1xf32>
    %62 = vector.broadcast %61 : vector<8x1xf32> to vector<8x8xf32>
    %63 = arith.divf %59, %62 : vector<8x8xf32>
    %cst_25 = arith.constant dense<0.000000e+00> : vector<8x128xf32>
    %64 = tpu.matmul %63, %41, %cst_25 {dimension_numbers = #tpu.dot_dimension_numbers<[1], [0], [0], [1], [0, 0, 1, 1], [], []>} : vector<8x8xf32>, vector<8x128xf32>, vector<8x128xf32> -> vector<8x128xf32>
    %cst_26 = arith.constant 0.000000e+00 : f32
    %65 = vector.broadcast %cst_26 : f32 to vector<8x128xf32>
    %66 = arith.cmpf ogt, %64, %65 : vector<8x128xf32>
    %cst_27 = arith.constant 0.000000e+00 : f32
    %67 = vector.broadcast %cst_27 : f32 to vector<8x128xf32>
    %68 = arith.minimumf %64, %67 : vector<8x128xf32>
    %69 = math.exp %68 : vector<8x128xf32>
    %cst_28 = arith.constant 1.000000e+00 : f32
    %70 = vector.broadcast %cst_28 : f32 to vector<8x128xf32>
    %71 = arith.subf %69, %70 : vector<8x128xf32>
    %72 = arith.select %66, %64, %71 : vector<8x128xi1>, vector<8x128xf32>
    %73 = vector.extract_strided_slice %72 {offsets = [0, 0], sizes = [8, 96], strides = [1, 1]} : vector<8x128xf32> to vector<8x96xf32>
    %c0_29 = arith.constant 0 : index
    %c0_30 = arith.constant 0 : index
    %c0_31 = arith.constant 0 : index
    %74 = vector.load %arg4[%c0_29, %c0_30, %c0_31] : memref<2x8x96xf32, #tpu.memory_space<vmem>>, vector<1x8x96xf32>
    %75 = vector.shape_cast %74 : vector<1x8x96xf32> to vector<8x96xf32>
    %76 = vector.shape_cast %73 : vector<8x96xf32> to vector<1x8x96xf32>
    tpu.vector_store %arg4[%c0_29, %c0_30, %c0_31], %76 {strides = array<i32>} : memref<2x8x96xf32, #tpu.memory_space<vmem>>, vector<1x8x96xf32>,
    %c1 = arith.constant 1 : index
    %c0_32 = arith.constant 0 : index
    %c0_33 = arith.constant 0 : index
    %77 = vector.load %arg1[%c1, %c0_32, %c0_33] : memref<2x8x8xf32, #tpu.memory_space<vmem>>, vector<1x8x8xf32>
    %78 = vector.shape_cast %77 : vector<1x8x8xf32> to vector<8x8xf32>
    %79 = math.absf %78 : vector<8x8xf32>
    %cst_34 = arith.constant 9.99999997E-7 : f32
    %80 = vector.broadcast %cst_34 : f32 to vector<8x8xf32>
    %81 = arith.cmpf ogt, %79, %80 : vector<8x8xf32>
    %c1_35 = arith.constant 1 : index
    %c0_36 = arith.constant 0 : index
    %c0_37 = arith.constant 0 : index
    %82 = vector.load %arg0[%c1_35, %c0_36, %c0_37] : memref<2x8x4xf32, #tpu.memory_space<vmem>>, vector<1x8x4xf32>
    %83 = vector.shape_cast %82 : vector<1x8x4xf32> to vector<8x4xf32>
    %cst_38 = arith.constant dense<0.000000e+00> : vector<8x128xf32>
    %84 = tpu.matmul %83, %0, %cst_38 {dimension_numbers = #tpu.dot_dimension_numbers<[1], [0], [0], [1], [0, 0, 1, 1], [], []>} : vector<8x4xf32>, vector<4x128xf32>, vector<8x128xf32> -> vector<8x128xf32>
    %85 = vector.extract_strided_slice %84 {offsets = [0, 96], sizes = [8, 1], strides = [1, 1]} : vector<8x128xf32> to vector<8x1xf32>
    %86 = tpu.transpose %84, [1, 0] : vector<8x128xf32> -> vector<128x8xf32>
    %87 = vector.extract_strided_slice %86 {offsets = [97, 0], sizes = [1, 8], strides = [1, 1]} : vector<128x8xf32> to vector<1x8xf32>
    %88 = vector.broadcast %85 : vector<8x1xf32> to vector<8x8xf32>
    %89 = vector.broadcast %87 : vector<1x8xf32> to vector<8x8xf32>
    %90 = arith.addf %88, %89 : vector<8x8xf32>
    %cst_39 = arith.constant 0.000000e+00 : f32
    %91 = vector.broadcast %cst_39 : f32 to vector<8x8xf32>
    %92 = arith.cmpf ogt, %90, %91 : vector<8x8xf32>
    %cst_40 = arith.constant 0.00999999977 : f32
    %93 = vector.broadcast %cst_40 : f32 to vector<8x8xf32>
    %94 = arith.mulf %93, %90 : vector<8x8xf32>
    %95 = arith.select %92, %90, %94 : vector<8x8xi1>, vector<8x8xf32>
    %cst_41 = arith.constant -9.000000e+15 : f32
    %96 = vector.broadcast %cst_41 : f32 to vector<8x8xf32>
    %97 = arith.select %81, %95, %96 : vector<8x8xi1>, vector<8x8xf32>
    %cst_42 = arith.constant dense<0xFF800000> : vector<8xf32>
    %98 = vector.multi_reduction <maximumf>, %97, %cst_42 [1] : vector<8x8xf32> to vector<8xf32>
    %99 = vector.shape_cast %98 : vector<8xf32> to vector<8x1xf32>
    %100 = vector.broadcast %99 : vector<8x1xf32> to vector<8x8xf32>
    %101 = arith.subf %97, %100 : vector<8x8xf32>
    %102 = math.exp %101 : vector<8x8xf32>
    %cst_43 = arith.constant dense<0.000000e+00> : vector<8xf32>
    %103 = vector.multi_reduction <add>, %102, %cst_43 [1] : vector<8x8xf32> to vector<8xf32>
    %104 = vector.shape_cast %103 : vector<8xf32> to vector<8x1xf32>
    %105 = vector.broadcast %104 : vector<8x1xf32> to vector<8x8xf32>
    %106 = arith.divf %102, %105 : vector<8x8xf32>
    %cst_44 = arith.constant dense<0.000000e+00> : vector<8x128xf32>
    %107 = tpu.matmul %106, %84, %cst_44 {dimension_numbers = #tpu.dot_dimension_numbers<[1], [0], [0], [1], [0, 0, 1, 1], [], []>} : vector<8x8xf32>, vector<8x128xf32>, vector<8x128xf32> -> vector<8x128xf32>
    %cst_45 = arith.constant 0.000000e+00 : f32
    %108 = vector.broadcast %cst_45 : f32 to vector<8x128xf32>
    %109 = arith.cmpf ogt, %107, %108 : vector<8x128xf32>
    %cst_46 = arith.constant 0.000000e+00 : f32
    %110 = vector.broadcast %cst_46 : f32 to vector<8x128xf32>
    %111 = arith.minimumf %107, %110 : vector<8x128xf32>
    %112 = math.exp %111 : vector<8x128xf32>
    %cst_47 = arith.constant 1.000000e+00 : f32
    %113 = vector.broadcast %cst_47 : f32 to vector<8x128xf32>
    %114 = arith.subf %112, %113 : vector<8x128xf32>
    %115 = arith.select %109, %107, %114 : vector<8x128xi1>, vector<8x128xf32>
    %cst_48 = arith.constant dense<0.000000e+00> : vector<8x128xf32>
    %116 = tpu.matmul %115, %1, %cst_48 {dimension_numbers = #tpu.dot_dimension_numbers<[1], [0], [0], [1], [0, 0, 1, 1], [], []>} : vector<8x128xf32>, vector<128x128xf32>, vector<8x128xf32> -> vector<8x128xf32>
    %117 = vector.extract_strided_slice %116 {offsets = [0, 96], sizes = [8, 1], strides = [1, 1]} : vector<8x128xf32> to vector<8x1xf32>
    %118 = tpu.transpose %116, [1, 0] : vector<8x128xf32> -> vector<128x8xf32>
    %119 = vector.extract_strided_slice %118 {offsets = [97, 0], sizes = [1, 8], strides = [1, 1]} : vector<128x8xf32> to vector<1x8xf32>
    %120 = vector.broadcast %117 : vector<8x1xf32> to vector<8x8xf32>
    %121 = vector.broadcast %119 : vector<1x8xf32> to vector<8x8xf32>
    %122 = arith.addf %120, %121 : vector<8x8xf32>
    %cst_49 = arith.constant 0.000000e+00 : f32
    %123 = vector.broadcast %cst_49 : f32 to vector<8x8xf32>
    %124 = arith.cmpf ogt, %122, %123 : vector<8x8xf32>
    %cst_50 = arith.constant 0.00999999977 : f32
    %125 = vector.broadcast %cst_50 : f32 to vector<8x8xf32>
    %126 = arith.mulf %125, %122 : vector<8x8xf32>
    %127 = arith.select %124, %122, %126 : vector<8x8xi1>, vector<8x8xf32>
    %cst_51 = arith.constant -9.000000e+15 : f32
    %128 = vector.broadcast %cst_51 : f32 to vector<8x8xf32>
    %129 = arith.select %81, %127, %128 : vector<8x8xi1>, vector<8x8xf32>
    %cst_52 = arith.constant dense<0xFF800000> : vector<8xf32>
    %130 = vector.multi_reduction <maximumf>, %129, %cst_52 [1] : vector<8x8xf32> to vector<8xf32>
    %131 = vector.shape_cast %130 : vector<8xf32> to vector<8x1xf32>
    %132 = vector.broadcast %131 : vector<8x1xf32> to vector<8x8xf32>
    %133 = arith.subf %129, %132 : vector<8x8xf32>
    %134 = math.exp %133 : vector<8x8xf32>
    %cst_53 = arith.constant dense<0.000000e+00> : vector<8xf32>
    %135 = vector.multi_reduction <add>, %134, %cst_53 [1] : vector<8x8xf32> to vector<8xf32>
    %136 = vector.shape_cast %135 : vector<8xf32> to vector<8x1xf32>
    %137 = vector.broadcast %136 : vector<8x1xf32> to vector<8x8xf32>
    %138 = arith.divf %134, %137 : vector<8x8xf32>
    %cst_54 = arith.constant dense<0.000000e+00> : vector<8x128xf32>
    %139 = tpu.matmul %138, %116, %cst_54 {dimension_numbers = #tpu.dot_dimension_numbers<[1], [0], [0], [1], [0, 0, 1, 1], [], []>} : vector<8x8xf32>, vector<8x128xf32>, vector<8x128xf32> -> vector<8x128xf32>
    %cst_55 = arith.constant 0.000000e+00 : f32
    %140 = vector.broadcast %cst_55 : f32 to vector<8x128xf32>
    %141 = arith.cmpf ogt, %139, %140 : vector<8x128xf32>
    %cst_56 = arith.constant 0.000000e+00 : f32
    %142 = vector.broadcast %cst_56 : f32 to vector<8x128xf32>
    %143 = arith.minimumf %139, %142 : vector<8x128xf32>
    %144 = math.exp %143 : vector<8x128xf32>
    %cst_57 = arith.constant 1.000000e+00 : f32
    %145 = vector.broadcast %cst_57 : f32 to vector<8x128xf32>
    %146 = arith.subf %144, %145 : vector<8x128xf32>
    %147 = arith.select %141, %139, %146 : vector<8x128xi1>, vector<8x128xf32>
    %148 = vector.extract_strided_slice %147 {offsets = [0, 0], sizes = [8, 96], strides = [1, 1]} : vector<8x128xf32> to vector<8x96xf32>
    %c1_58 = arith.constant 1 : index
    %c0_59 = arith.constant 0 : index
    %c0_60 = arith.constant 0 : index
    %149 = vector.load %arg4[%c1_58, %c0_59, %c0_60] : memref<2x8x96xf32, #tpu.memory_space<vmem>>, vector<1x8x96xf32>
    %150 = vector.shape_cast %149 : vector<1x8x96xf32> to vector<8x96xf32>
    %151 = vector.shape_cast %148 : vector<8x96xf32> to vector<1x8x96xf32>
    tpu.vector_store %arg4[%c1_58, %c0_59, %c0_60], %151 {strides = array<i32>} : memref<2x8x96xf32, #tpu.memory_space<vmem>>, vector<1x8x96xf32>,
    return
  }
}

</mosaic_0001>

<llo_original>
// kernel: gat_forward.1
$region0: #{gat_forward.1}
  #allocation0 [shape = 'u32[]', space=smem, size = 0x4, offset = 0x4, fixed_abs, tag = 'smem constant byte address 0x4 - core index']
  #allocation1 [shape = 'u32[72,128]{1,0:T(1,128)}', space=vmem, size = 0x9000, scoped, tag = 'internal scratch']
  %s0 = inlined_call_operand.vmem [shape: f32[2,8,4], index: 0, kind: input, shape index: {}]
  %s1 = inlined_call_operand.vmem [shape: f32[2,8,8], index: 1, kind: input, shape index: {}]
  %s2 = inlined_call_operand.vmem [shape: f32[4,128], index: 2, kind: input, shape index: {}]
  %s3 = inlined_call_operand.vmem [shape: f32[128,128], index: 3, kind: input, shape index: {}]
  %s4 = inlined_call_operand.hbm [shape: f32[2,8,96], index: 4, kind: output, shape index: {}]
  %s5 = sld [smem:[#allocation0]]
  $region26: #{gat_forward.1} parent=0
    _
  %s7 = ssub.s32 1, %s5
  %s8 = scalar_select 0, %s7, %s5
  $region1: #{gat_forward.1} parent=0
    #allocation2 [shape = 'u8[8192]{0}', space=vmem, size = 0x2000, scoped, tag = 'output window, operand 0, single buffered']
    #allocation3 [shape = 's32[1]{0}', space=sflag, size = 0x4, scoped, tag = 'scoped memory for gat_forward.1']
    %9 = vsyncpa [#allocation3], 0
    // Predicated region
    $region2: #{gat_forward.1} parent=1 // pred_check
      _
    $region3: #{gat_forward.1} parent=1 // pred_check_branch
      %11 = sbr.rel (0) target = $region5
    $region4: #{gat_forward.1} parent=1 // pred_region
      _
    $region5: #{gat_forward.1} parent=1 // pred_fallthru
      _
    // Predicated region
    $region6: #{gat_forward.1} parent=1 // pred_check
      _
    $region7: #{gat_forward.1} parent=1 // pred_check_branch
      %13 = sbr.rel (0) target = $region9
    $region8: #{gat_forward.1} parent=1 // pred_region
      _
    $region9: #{gat_forward.1} parent=1 // pred_fallthru
      _
    // Predicated region
    $region10: #{gat_forward.1} parent=1 // pred_check
      _
    $region11: #{gat_forward.1} parent=1 // pred_check_branch
      %15 = sbr.rel (0) target = $region13
    $region12: #{gat_forward.1} parent=1 // pred_region
      _
    $region13: #{gat_forward.1} parent=1 // pred_fallthru
      _
    // Predicated region
    $region14: #{gat_forward.1} parent=1 // pred_check
      _
    $region15: #{gat_forward.1} parent=1 // pred_check_branch
      %17 = sbr.rel (0) target = $region17
    $region16: #{gat_forward.1} parent=1 // pred_region
      _
    $region17: #{gat_forward.1} parent=1 // pred_fallthru
      _
    %v18 = vld [vmem:[%s2] sm:$0xf]
    %v19 = vld [vmem:[%s3] sm:$0xff]
    %v20 = vld [vmem:[%s3 + $0x8] sm:$0xff]
    %v21 = vld [vmem:[%s3 + $0x10] sm:$0xff]
    %v22 = vld [vmem:[%s3 + $0x18] sm:$0xff]
    %v23 = vld [vmem:[%s3 + $0x20] sm:$0xff]
    %v24 = vld [vmem:[%s3 + $0x28] sm:$0xff]
    %v25 = vld [vmem:[%s3 + $0x30] sm:$0xff]
    %v26 = vld [vmem:[%s3 + $0x38] sm:$0xff]
    %v27 = vld [vmem:[%s3 + $0x40] sm:$0xff]
    %v28 = vld [vmem:[%s3 + $0x48] sm:$0xff]
    %v29 = vld [vmem:[%s3 + $0x50] sm:$0xff]
    %v30 = vld [vmem:[%s3 + $0x58] sm:$0xff]
    %v31 = vld [vmem:[%s3 + $0x60] sm:$0xff]
    %v32 = vld [vmem:[%s3 + $0x68] sm:$0xff]
    %v33 = vld [vmem:[%s3 + $0x70] sm:$0xff]
    %v34 = vld [vmem:[%s3 + $0x78] sm:$0xff]
    %v35 = vld [vmem:[%s1] sm:$0xff]
    %v36 = vand.u32 2147483647, %v35
    %vm37 = vcmp.gt.f32.partialorder %v36, 1e-06
    %v38 = vld [vmem:[%s0] sm:$0xff]
    %vm39 = vcmask 31744
    %v41 = vsel %vm39, %v38, 0
    %vm43 = vcmask 1043456
    %v45 = vsel %vm43, %v18, 0
    %47 = vmatpush.msra.mxu0 0.0
    %48 = vmatpush.msra.mxu0 0.0
    %49 = vmatpush.msra.mxu0 0.0
    %50 = vmatpush.msra.mxu0 0.0
    %51 = vmatpush.msra.mxu0 0.0
    %52 = vmatpush.msra.mxu0 0.0
    %53 = vmatpush.msra.mxu0 0.0
    %54 = vmatpush.msra.mxu0 0.0
    %55 = vmatpush.msra.mxu0 0.0
    %56 = vmatpush.msra.mxu0 0.0
    %57 = vmatpush.msra.mxu0 0.0
    %58 = vmatpush.msra.mxu0 0.0
    %59 = vmatpush.msra.mxu0 0.0
    %60 = vmatpush.msra.mxu0 0.0
    %61 = vmatpush.msra.mxu0 0.0
    %62 = vmatpush.msra.mxu0 %v45
    %63 = vmatmul.f32.gmra.mxu0 %v41
    %v64 = vpop.f32.mrf.mxu0
    %v65 = vadd.f32 0.0, %v64
    %66 = vdwg.mxu0
    %67 = vxpose.xlu0.b32.start [1/16] %v65, 128
    %68 = vxpose.xlu0.b32.cont [2/16] 0.0, 128
    %69 = vxpose.xlu0.b32.cont [3/16] 0.0, 128
    %70 = vxpose.xlu0.b32.cont [4/16] 0.0, 128
    %71 = vxpose.xlu0.b32.cont [5/16] 0.0, 128
    %72 = vxpose.xlu0.b32.cont [6/16] 0.0, 128
    %73 = vxpose.xlu0.b32.cont [7/16] 0.0, 128
    %74 = vxpose.xlu0.b32.cont [8/16] 0.0, 128
    %75 = vxpose.xlu0.b32.cont [9/16] 0.0, 128
    %76 = vxpose.xlu0.b32.cont [10/16] 0.0, 128
    %77 = vxpose.xlu0.b32.cont [11/16] 0.0, 128
    %78 = vxpose.xlu0.b32.cont [12/16] 0.0, 128
    %79 = vxpose.xlu0.b32.cont [13/16] 0.0, 128
    %80 = vxpose.xlu0.b32.cont [14/16] 0.0, 128
    %81 = vxpose.xlu0.b32.cont [15/16] 0.0, 128
    %82 = vxpose.xlu0.b32.end [16/16] 0.0, 128
    %v83 = vpop.trf.xlu0
    %v84 = vpop.trf.xlu0
    %v85 = vpop.trf.xlu0
    %v86 = vpop.trf.xlu0
    %v87 = vpop.trf.xlu0
    %v88 = vpop.trf.xlu0
    %v89 = vpop.trf.xlu0
    %v90 = vpop.trf.xlu0
    %v91 = vpop.trf.xlu0
    %v92 = vpop.trf.xlu0
    %v93 = vpop.trf.xlu0
    %v94 = vpop.trf.xlu0
    %v95 = vpop.trf.xlu0
    %v96 = vpop.trf.xlu0
    %v97 = vpop.trf.xlu0
    %v98 = vpop.trf.xlu0
    %100 = vset.pattern.permute.xlu0 96
    %101 = vperm.xlu0 %100, %v65
    %v102 = vpop.permute.xlu0 %101
    %v104 = vperm.slane %v95, 1
    %v105 = vadd.f32 %v102, %v104
    %vm106 = vcmp.gt.f32.partialorder %v105, 0.0
    %v107 = vmul.f32 %v105, 0.01
    %v108 = vsel %vm106, %v105, %v107
    %v109 = vsel %vm37, %v108, -9e+15
    %vm110 = vcmask 64512
    %v111 = vsel %vm110, %v109, -inf
    %112 = vmax.xlane.f32.xlu0 %v111
    %v113 = vpop.xlane.xlu0 %112
    %v114 = vsub.f32 %v109, %v113
    %v115 = vmul.f32 %v114, 1.442695
    %v116 = vpow.pop %v115
    %v117 = vsel %vm110, %v116, 0.0
    %118 = vadd.xlane.f32.xlu0 %v117
    %v119 = vpop.xlane.xlu0 %118
    %v120 = vrcp.pop %v119
    %v121 = vmul.f32 %v119, %v120
    %v122 = vsub.f32 1.0, %v121
    %v123 = vmul.f32 %v120, %v122
    %v124 = vadd.f32 %v120, %v123
    %vm125 = vweird.f32 %v119
    %vm126 = vweird.f32 %v120
    %vm127 = vmor %vm125, %vm126
    %v128 = vsel %vm127, %v120, %v124
    %v129 = vand.u32 2147483647, %v119
    %vm130 = vcmp.eq.f32.partialorder %v129, 8.507059e+37
    %v131 = vand.u32 %v119, 2147483648
    %v132 = vor.u32 1.1754944e-38, %v131
    %v133 = vsel %vm130, %v132, %v128
    %v134 = vmul.f32 %v116, %v133
    %v136 = vsel %vm110, %v134, 0
    %138 = vmatpush.msra.mxu0 0.0
    %139 = vmatpush.msra.mxu0 0.0
    %140 = vmatpush.msra.mxu0 0.0
    %141 = vmatpush.msra.mxu0 0.0
    %142 = vmatpush.msra.mxu0 0.0
    %143 = vmatpush.msra.mxu0 0.0
    %144 = vmatpush.msra.mxu0 0.0
    %145 = vmatpush.msra.mxu0 0.0
    %146 = vmatpush.msra.mxu0 0.0
    %147 = vmatpush.msra.mxu0 0.0
    %148 = vmatpush.msra.mxu0 0.0
    %149 = vmatpush.msra.mxu0 0.0
    %150 = vmatpush.msra.mxu0 0.0
    %151 = vmatpush.msra.mxu0 0.0
    %152 = vmatpush.msra.mxu0 0.0
    %153 = vmatpush.msra.mxu0 %v65
    %154 = vmatmul.f32.gmra.mxu0 %v136
    %v155 = vpop.f32.mrf.mxu0
    %v156 = vadd.f32 0.0, %v155
    %157 = vdwg.mxu0
    %vm158 = vcmp.gt.f32.partialorder %v156, 0.0
    %v159 = vmin.f32 %v156, 0.0
    %v160 = vmul.f32 %v159, 1.442695
    %v161 = vpow.pop %v160
    %v162 = vsub.f32 %v161, 1.0
    %v163 = vsel %vm158, %v156, %v162
    %164 = vmatpush.msra.mxu0 %v34
    %165 = vmatpush.msra.mxu0 %v33
    %166 = vmatpush.msra.mxu0 %v32
    %167 = vmatpush.msra.mxu0 %v31
    %168 = vmatpush.msra.mxu0 %v30
    %169 = vmatpush.msra.mxu0 %v29
    %170 = vmatpush.msra.mxu0 %v28
    %171 = vmatpush.msra.mxu0 %v27
    %172 = vmatpush.msra.mxu0 %v26
    %173 = vmatpush.msra.mxu0 %v25
    %174 = vmatpush.msra.mxu0 %v24
    %175 = vmatpush.msra.mxu0 %v23
    %176 = vmatpush.msra.mxu0 %v22
    %177 = vmatpush.msra.mxu0 %v21
    %178 = vmatpush.msra.mxu0 %v20
    %179 = vmatpush.msra.mxu0 %v19
    %180 = vmatmul.f32.gmra.mxu0 %v163
    %v181 = vpop.f32.mrf.mxu0
    %v182 = vadd.f32 0.0, %v181
    %183 = vdwg.mxu0
    %184 = vxpose.xlu0.b32.start [1/16] %v182, 128
    %185 = vxpose.xlu0.b32.cont [2/16] 0.0, 128
    %186 = vxpose.xlu0.b32.cont [3/16] 0.0, 128
    %187 = vxpose.xlu0.b32.cont [4/16] 0.0, 128
    %188 = vxpose.xlu0.b32.cont [5/16] 0.0, 128
    %189 = vxpose.xlu0.b32.cont [6/16] 0.0, 128
    %190 = vxpose.xlu0.b32.cont [7/16] 0.0, 128
    %191 = vxpose.xlu0.b32.cont [8/16] 0.0, 128
    %192 = vxpose.xlu0.b32.cont [9/16] 0.0, 128
    %193 = vxpose.xlu0.b32.cont [10/16] 0.0, 128
    %194 = vxpose.xlu0.b32.cont [11/16] 0.0, 128
    %195 = vxpose.xlu0.b32.cont [12/16] 0.0, 128
    %196 = vxpose.xlu0.b32.cont [13/16] 0.0, 128
    %197 = vxpose.xlu0.b32.cont [14/16] 0.0, 128
    %198 = vxpose.xlu0.b32.cont [15/16] 0.0, 128
    %199 = vxpose.xlu0.b32.end [16/16] 0.0, 128
    %v200 = vpop.trf.xlu0
    %v201 = vpop.trf.xlu0
    %v202 = vpop.trf.xlu0
    %v203 = vpop.trf.xlu0
    %v204 = vpop.trf.xlu0
    %v205 = vpop.trf.xlu0
    %v206 = vpop.trf.xlu0
    %v207 = vpop.trf.xlu0
    %v208 = vpop.trf.xlu0
    %v209 = vpop.trf.xlu0
    %v210 = vpop.trf.xlu0
    %v211 = vpop.trf.xlu0
    %v212 = vpop.trf.xlu0
    %v213 = vpop.trf.xlu0
    %v214 = vpop.trf.xlu0
    %v215 = vpop.trf.xlu0
    %217 = vset.pattern.permute.xlu0 96
    %218 = vperm.xlu0 %217, %v182
    %v219 = vpop.permute.xlu0 %218
    %v221 = vperm.slane %v212, 1
    %v222 = vadd.f32 %v219, %v221
    %vm223 = vcmp.gt.f32.partialorder %v222, 0.0
    %v224 = vmul.f32 %v222, 0.01
    %v225 = vsel %vm223, %v222, %v224
    %v226 = vsel %vm37, %v225, -9e+15
    %v227 = vsel %vm110, %v226, -inf
    %228 = vmax.xlane.f32.xlu0 %v227
    %v229 = vpop.xlane.xlu0 %228
    %v230 = vsub.f32 %v226, %v229
    %v231 = vmul.f32 %v230, 1.442695
    %v232 = vpow.pop %v231
    %v233 = vsel %vm110, %v232, 0.0
    %234 = vadd.xlane.f32.xlu0 %v233
    %v235 = vpop.xlane.xlu0 %234
    %v236 = vrcp.pop %v235
    %v237 = vmul.f32 %v235, %v236
    %v238 = vsub.f32 1.0, %v237
    %v239 = vmul.f32 %v236, %v238
    %v240 = vadd.f32 %v236, %v239
    %vm241 = vweird.f32 %v235
    %vm242 = vweird.f32 %v236
    %vm243 = vmor %vm241, %vm242
    %v244 = vsel %vm243, %v236, %v240
    %v245 = vand.u32 2147483647, %v235
    %vm246 = vcmp.eq.f32.partialorder %v245, 8.507059e+37
    %v247 = vand.u32 %v235, 2147483648
    %v248 = vor.u32 1.1754944e-38, %v247
    %v249 = vsel %vm246, %v248, %v244
    %v250 = vmul.f32 %v232, %v249
    %v252 = vsel %vm110, %v250, 0
    %254 = vmatpush.msra.mxu0 0.0
    %255 = vmatpush.msra.mxu0 0.0
    %256 = vmatpush.msra.mxu0 0.0
    %257 = vmatpush.msra.mxu0 0.0
    %258 = vmatpush.msra.mxu0 0.0
    %259 = vmatpush.msra.mxu0 0.0
    %260 = vmatpush.msra.mxu0 0.0
    %261 = vmatpush.msra.mxu0 0.0
    %262 = vmatpush.msra.mxu0 0.0
    %263 = vmatpush.msra.mxu0 0.0
    %264 = vmatpush.msra.mxu0 0.0
    %265 = vmatpush.msra.mxu0 0.0
    %266 = vmatpush.msra.mxu0 0.0
    %267 = vmatpush.msra.mxu0 0.0
    %268 = vmatpush.msra.mxu0 0.0
    %269 = vmatpush.msra.mxu0 %v182
    %270 = vmatmul.f32.gmra.mxu0 %v252
    %v271 = vpop.f32.mrf.mxu0
    %v272 = vadd.f32 0.0, %v271
    %273 = vdwg.mxu0
    %vm274 = vcmp.gt.f32.partialorder %v272, 0.0
    %v275 = vmin.f32 %v272, 0.0
    %v276 = vmul.f32 %v275, 1.442695
    %v277 = vpow.pop %v276
    %v278 = vsub.f32 %v277, 1.0
    %v279 = vsel %vm274, %v272, %v278
    %vm280 = vcmask 785408
    %281 = vst.msk [vmem:[#allocation2] sm:$0xff] %vm280, %v279
    %s282 = scalar_lea.vmem %s1, 8
    %v283 = vld [vmem:[%s282] sm:$0xff]
    %v284 = vand.u32 2147483647, %v283
    %vm285 = vcmp.gt.f32.partialorder %v284, 1e-06
    %s286 = scalar_lea.vmem %s0, 8
    %v287 = vld [vmem:[%s286] sm:$0xff]
    %v289 = vsel %vm39, %v287, 0
    %291 = vmatpush.msra.mxu0 0.0
    %292 = vmatpush.msra.mxu0 0.0
    %293 = vmatpush.msra.mxu0 0.0
    %294 = vmatpush.msra.mxu0 0.0
    %295 = vmatpush.msra.mxu0 0.0
    %296 = vmatpush.msra.mxu0 0.0
    %297 = vmatpush.msra.mxu0 0.0
    %298 = vmatpush.msra.mxu0 0.0
    %299 = vmatpush.msra.mxu0 0.0
    %300 = vmatpush.msra.mxu0 0.0
    %301 = vmatpush.msra.mxu0 0.0
    %302 = vmatpush.msra.mxu0 0.0
    %303 = vmatpush.msra.mxu0 0.0
    %304 = vmatpush.msra.mxu0 0.0
    %305 = vmatpush.msra.mxu0 0.0
    %306 = vmatpush.msra.mxu0 %v45
    %307 = vmatmul.f32.gmra.mxu0 %v289
    %v308 = vpop.f32.mrf.mxu0
    %v309 = vadd.f32 0.0, %v308
    %310 = vdwg.mxu0
    %311 = vxpose.xlu0.b32.start [1/16] %v309, 128
    %312 = vxpose.xlu0.b32.cont [2/16] 0.0, 128
    %313 = vxpose.xlu0.b32.cont [3/16] 0.0, 128
    %314 = vxpose.xlu0.b32.cont [4/16] 0.0, 128
    %315 = vxpose.xlu0.b32.cont [5/16] 0.0, 128
    %316 = vxpose.xlu0.b32.cont [6/16] 0.0, 128
    %317 = vxpose.xlu0.b32.cont [7/16] 0.0, 128
    %318 = vxpose.xlu0.b32.cont [8/16] 0.0, 128
    %319 = vxpose.xlu0.b32.cont [9/16] 0.0, 128
    %320 = vxpose.xlu0.b32.cont [10/16] 0.0, 128
    %321 = vxpose.xlu0.b32.cont [11/16] 0.0, 128
    %322 = vxpose.xlu0.b32.cont [12/16] 0.0, 128
    %323 = vxpose.xlu0.b32.cont [13/16] 0.0, 128
    %324 = vxpose.xlu0.b32.cont [14/16] 0.0, 128
    %325 = vxpose.xlu0.b32.cont [15/16] 0.0, 128
    %326 = vxpose.xlu0.b32.end [16/16] 0.0, 128
    %v327 = vpop.trf.xlu0
    %v328 = vpop.trf.xlu0
    %v329 = vpop.trf.xlu0
    %v330 = vpop.trf.xlu0
    %v331 = vpop.trf.xlu0
    %v332 = vpop.trf.xlu0
    %v333 = vpop.trf.xlu0
    %v334 = vpop.trf.xlu0
    %v335 = vpop.trf.xlu0
    %v336 = vpop.trf.xlu0
    %v337 = vpop.trf.xlu0
    %v338 = vpop.trf.xlu0
    %v339 = vpop.trf.xlu0
    %v340 = vpop.trf.xlu0
    %v341 = vpop.trf.xlu0
    %v342 = vpop.trf.xlu0
    %344 = vset.pattern.permute.xlu0 96
    %345 = vperm.xlu0 %344, %v309
    %v346 = vpop.permute.xlu0 %345
    %v348 = vperm.slane %v339, 1
    %v349 = vadd.f32 %v346, %v348
    %vm350 = vcmp.gt.f32.partialorder %v349, 0.0
    %v351 = vmul.f32 %v349, 0.01
    %v352 = vsel %vm350, %v349, %v351
    %v353 = vsel %vm285, %v352, -9e+15
    %v354 = vsel %vm110, %v353, -inf
    %355 = vmax.xlane.f32.xlu0 %v354
    %v356 = vpop.xlane.xlu0 %355
    %v357 = vsub.f32 %v353, %v356
    %v358 = vmul.f32 %v357, 1.442695
    %v359 = vpow.pop %v358
    %v360 = vsel %vm110, %v359, 0.0
    %361 = vadd.xlane.f32.xlu0 %v360
    %v362 = vpop.xlane.xlu0 %361
    %v363 = vrcp.pop %v362
    %v364 = vmul.f32 %v362, %v363
    %v365 = vsub.f32 1.0, %v364
    %v366 = vmul.f32 %v363, %v365
    %v367 = vadd.f32 %v363, %v366
    %vm368 = vweird.f32 %v362
    %vm369 = vweird.f32 %v363
    %vm370 = vmor %vm368, %vm369
    %v371 = vsel %vm370, %v363, %v367
    %v372 = vand.u32 2147483647, %v362
    %vm373 = vcmp.eq.f32.partialorder %v372, 8.507059e+37
    %v374 = vand.u32 %v362, 2147483648
    %v375 = vor.u32 1.1754944e-38, %v374
    %v376 = vsel %vm373, %v375, %v371
    %v377 = vmul.f32 %v359, %v376
    %v379 = vsel %vm110, %v377, 0
    %381 = vmatpush.msra.mxu0 0.0
    %382 = vmatpush.msra.mxu0 0.0
    %383 = vmatpush.msra.mxu0 0.0
    %384 = vmatpush.msra.mxu0 0.0
    %385 = vmatpush.msra.mxu0 0.0
    %386 = vmatpush.msra.mxu0 0.0
    %387 = vmatpush.msra.mxu0 0.0
    %388 = vmatpush.msra.mxu0 0.0
    %389 = vmatpush.msra.mxu0 0.0
    %390 = vmatpush.msra.mxu0 0.0
    %391 = vmatpush.msra.mxu0 0.0
    %392 = vmatpush.msra.mxu0 0.0
    %393 = vmatpush.msra.mxu0 0.0
    %394 = vmatpush.msra.mxu0 0.0
    %395 = vmatpush.msra.mxu0 0.0
    %396 = vmatpush.msra.mxu0 %v309
    %397 = vmatmul.f32.gmra.mxu0 %v379
    %v398 = vpop.f32.mrf.mxu0
    %v399 = vadd.f32 0.0, %v398
    %400 = vdwg.mxu0
    %vm401 = vcmp.gt.f32.partialorder %v399, 0.0
    %v402 = vmin.f32 %v399, 0.0
    %v403 = vmul.f32 %v402, 1.442695
    %v404 = vpow.pop %v403
    %v405 = vsub.f32 %v404, 1.0
    %v406 = vsel %vm401, %v399, %v405
    %407 = vmatpush.msra.mxu0 %v34
    %408 = vmatpush.msra.mxu0 %v33
    %409 = vmatpush.msra.mxu0 %v32
    %410 = vmatpush.msra.mxu0 %v31
    %411 = vmatpush.msra.mxu0 %v30
    %412 = vmatpush.msra.mxu0 %v29
    %413 = vmatpush.msra.mxu0 %v28
    %414 = vmatpush.msra.mxu0 %v27
    %415 = vmatpush.msra.mxu0 %v26
    %416 = vmatpush.msra.mxu0 %v25
    %417 = vmatpush.msra.mxu0 %v24
    %418 = vmatpush.msra.mxu0 %v23
    %419 = vmatpush.msra.mxu0 %v22
    %420 = vmatpush.msra.mxu0 %v21
    %421 = vmatpush.msra.mxu0 %v20
    %422 = vmatpush.msra.mxu0 %v19
    %423 = vmatmul.f32.gmra.mxu0 %v406
    %v424 = vpop.f32.mrf.mxu0
    %v425 = vadd.f32 0.0, %v424
    %426 = vdwg.mxu0
    %427 = vxpose.xlu0.b32.start [1/16] %v425, 128
    %428 = vxpose.xlu0.b32.cont [2/16] 0.0, 128
    %429 = vxpose.xlu0.b32.cont [3/16] 0.0, 128
    %430 = vxpose.xlu0.b32.cont [4/16] 0.0, 128
    %431 = vxpose.xlu0.b32.cont [5/16] 0.0, 128
    %432 = vxpose.xlu0.b32.cont [6/16] 0.0, 128
    %433 = vxpose.xlu0.b32.cont [7/16] 0.0, 128
    %434 = vxpose.xlu0.b32.cont [8/16] 0.0, 128
    %435 = vxpose.xlu0.b32.cont [9/16] 0.0, 128
    %436 = vxpose.xlu0.b32.cont [10/16] 0.0, 128
    %437 = vxpose.xlu0.b32.cont [11/16] 0.0, 128
    %438 = vxpose.xlu0.b32.cont [12/16] 0.0, 128
    %439 = vxpose.xlu0.b32.cont [13/16] 0.0, 128
    %440 = vxpose.xlu0.b32.cont [14/16] 0.0, 128
    %441 = vxpose.xlu0.b32.cont [15/16] 0.0, 128
    %442 = vxpose.xlu0.b32.end [16/16] 0.0, 128
    %v443 = vpop.trf.xlu0
    %v444 = vpop.trf.xlu0
    %v445 = vpop.trf.xlu0
    %v446 = vpop.trf.xlu0
    %v447 = vpop.trf.xlu0
    %v448 = vpop.trf.xlu0
    %v449 = vpop.trf.xlu0
    %v450 = vpop.trf.xlu0
    %v451 = vpop.trf.xlu0
    %v452 = vpop.trf.xlu0
    %v453 = vpop.trf.xlu0
    %v454 = vpop.trf.xlu0
    %v455 = vpop.trf.xlu0
    %v456 = vpop.trf.xlu0
    %v457 = vpop.trf.xlu0
    %v458 = vpop.trf.xlu0
    %460 = vset.pattern.permute.xlu0 96
    %461 = vperm.xlu0 %460, %v425
    %v462 = vpop.permute.xlu0 %461
    %v464 = vperm.slane %v455, 1
    %v465 = vadd.f32 %v462, %v464
    %vm466 = vcmp.gt.f32.partialorder %v465, 0.0
    %v467 = vmul.f32 %v465, 0.01
    %v468 = vsel %vm466, %v465, %v467
    %v469 = vsel %vm285, %v468, -9e+15
    %v470 = vsel %vm110, %v469, -inf
    %471 = vmax.xlane.f32.xlu0 %v470
    %v472 = vpop.xlane.xlu0 %471
    %v473 = vsub.f32 %v469, %v472
    %v474 = vmul.f32 %v473, 1.442695
    %v475 = vpow.pop %v474
    %v476 = vsel %vm110, %v475, 0.0
    %477 = vadd.xlane.f32.xlu0 %v476
    %v478 = vpop.xlane.xlu0 %477
    %v479 = vrcp.pop %v478
    %v480 = vmul.f32 %v478, %v479
    %v481 = vsub.f32 1.0, %v480
    %v482 = vmul.f32 %v479, %v481
    %v483 = vadd.f32 %v479, %v482
    %vm484 = vweird.f32 %v478
    %vm485 = vweird.f32 %v479
    %vm486 = vmor %vm484, %vm485
    %v487 = vsel %vm486, %v479, %v483
    %v488 = vand.u32 2147483647, %v478
    %vm489 = vcmp.eq.f32.partialorder %v488, 8.507059e+37
    %v490 = vand.u32 %v478, 2147483648
    %v491 = vor.u32 1.1754944e-38, %v490
    %v492 = vsel %vm489, %v491, %v487
    %v493 = vmul.f32 %v475, %v492
    %v495 = vsel %vm110, %v493, 0
    %497 = vmatpush.msra.mxu0 0.0
    %498 = vmatpush.msra.mxu0 0.0
    %499 = vmatpush.msra.mxu0 0.0
    %500 = vmatpush.msra.mxu0 0.0
    %501 = vmatpush.msra.mxu0 0.0
    %502 = vmatpush.msra.mxu0 0.0
    %503 = vmatpush.msra.mxu0 0.0
    %504 = vmatpush.msra.mxu0 0.0
    %505 = vmatpush.msra.mxu0 0.0
    %506 = vmatpush.msra.mxu0 0.0
    %507 = vmatpush.msra.mxu0 0.0
    %508 = vmatpush.msra.mxu0 0.0
    %509 = vmatpush.msra.mxu0 0.0
    %510 = vmatpush.msra.mxu0 0.0
    %511 = vmatpush.msra.mxu0 0.0
    %512 = vmatpush.msra.mxu0 %v425
    %513 = vmatmul.f32.gmra.mxu0 %v495
    %v514 = vpop.f32.mrf.mxu0
    %v515 = vadd.f32 0.0, %v514
    %516 = vdwg.mxu0
    %vm517 = vcmp.gt.f32.partialorder %v515, 0.0
    %v518 = vmin.f32 %v515, 0.0
    %v519 = vmul.f32 %v518, 1.442695
    %v520 = vpow.pop %v519
    %v521 = vsub.f32 %v520, 1.0
    %v522 = vsel %vm517, %v515, %v521
    %s523 = scalar_lea.vmem [#allocation2], 8
    %524 = vst.msk [vmem:[%s523] sm:$0xff] %vm280, %v522
    // Predicated region
    $region18: #{gat_forward.1} parent=1 // pred_check
      _
    $region19: #{gat_forward.1} parent=1 // pred_check_branch
      %526 = sbr.rel (0) target = $region21
    $region20: #{gat_forward.1} parent=1 // pred_region
      %528 = vsyncadd [#allocation3], 0
      %s529 = sshll.u32 [#allocation2], 4
      %s530 = int_to_ptr.vmem [resolvable:$true] %s529
      %s531 = sshll.u32 %s4, 4
      %s532 = int_to_ptr.hbm [resolvable:$true] %s531
      %537 = dma.vmem_to_hbm [thread:$0]  %s530, 256, %s532, [#allocation3], 128, 128, 8
    $region21: #{gat_forward.1} parent=1 // pred_fallthru
      _
    // Predicated region
    $region22: #{gat_forward.1} parent=1 // pred_check
      _
    $region23: #{gat_forward.1} parent=1 // pred_check_branch
      %539 = sbr.rel (0) target = $region25
    $region24: #{gat_forward.1} parent=1 // pred_region
      %541 = dma.done [#allocation3], 256
    $region25: #{gat_forward.1} parent=1 // pred_fallthru
      _
    %542 = vsyncpa [#allocation3], 1

</llo_original>
